<compile_context>
chip_gen: v5e
topology: v5e:2x2
jax: 0.10.0
libtpu: 0.0.40
codegen_flags: <defaults>
</compile_context>

<pallas_src>
import functools

import numpy as np
import jax
import jax.numpy as jnp
from jax import lax
from jax.experimental import pallas as pl
from jax.experimental.pallas import tpu as pltpu

_MIB = 1024 * 1024


def _round_up(x, m):
    return ((x + m - 1) // m) * m


def _pick_tile(n, unit, cap):
    """Largest legal tile: either == n (full dim) or a multiple of `unit` <= cap."""
    if n <= unit:
        return n                       # full-dim block (legal even if < unit)
    if n % unit == 0:
        return min(n, cap)
    return min(cap, (n // unit) * unit)  # aligned tile; cdiv grid masks remainder


def _block_bytes(shape, itemsize=4):
    """VMEM bytes of one block, accounting for (8, 128) register-tile padding."""
    dims = list(int(d) for d in shape)
    dims[-1] = _round_up(dims[-1], 128)
    if len(dims) >= 2:
        dims[-2] = _round_up(dims[-2], 8)
    n = itemsize
    for d in dims:
        n *= d
    return n


def _vmem_needs(C, P, tg, ts, lr_buffers):
    v_blk = _block_bytes((C, tg, P))
    w_blk = _block_bytes((C, P, ts))
    lr_blk = _block_bytes((C, tg, ts))
    out_blk = _block_bytes((tg, ts))
    fused = 2 * (v_blk + w_blk + lr_blk) + 2 * out_blk
    cgrid = (2 * (_block_bytes((1, tg, P)) + _block_bytes((1, P, ts)))
             + lr_buffers * _block_bytes((1, tg, ts)) + 2 * out_blk)
    return fused, cgrid


def _tpu_vmem_capacity():
    try:
        return int(pltpu.get_tpu_info().vmem_capacity_bytes)
    except Exception:
        return 128 * _MIB


def _is_identity(idx, n):
    try:
        a = np.asarray(idx)            # fails cleanly for tracers
    except Exception:
        return False
    return a.ndim == 1 and a.shape[0] == n and np.array_equal(a, np.arange(n))


def _stp_kernel_fused_c(v_ref, w_ref, lr_ref, o_ref, *, unroll):
    """Cell-type axis collapsed into the kernel (small C).

    v_ref: (C, tg, P)  w_ref: (C, P, ts)  lr_ref: (C, tg, ts)  o_ref: (tg, ts)
    """
    n_cell_types = v_ref.shape[0]

    def body(c, acc):
        vw = jnp.dot(v_ref[c], w_ref[c],
                     preferred_element_type=jnp.float32,
                     precision=lax.Precision.HIGHEST)
        return acc + jnp.exp(lr_ref[c] + vw)

    o_ref[...] = lax.fori_loop(0, n_cell_types, body,
                               jnp.zeros(o_ref.shape, jnp.float32),
                               unroll=unroll)


def _stp_kernel_c_grid(v_ref, w_ref, lr_ref, o_ref):
    """Cell types on the innermost ('arbitrary') grid axis; accumulate in o_ref."""
    @pl.when(pl.program_id(2) == 0)
    def _():
        o_ref[...] = jnp.zeros_like(o_ref)

    vw = jnp.dot(v_ref[0], w_ref[0],
                 preferred_element_type=jnp.float32,
                 precision=lax.Precision.HIGHEST)
    o_ref[...] += jnp.exp(lr_ref[0] + vw)


def spatial_programs_forward(log_rates, W, V, spots, genes,
                             *, tg_max=512, ts_max=1024, force_c_grid=None):
    """JAX/Pallas equivalent of SpatialPrograms.forward(spots, genes).

    log_rates: (C, n_genes, n_spots) f32
    W:         (C, n_programs, n_spots) f32
    V:         (C, n_genes, n_programs) f32
    spots:     (S,) int indices into n_spots
    genes:     (G,) int indices into n_genes
    returns:   (G, S) f32
    """
    C, P, n_spots = W.shape
    n_genes = V.shape[1]
    genes = jnp.asarray(genes, jnp.int32)
    spots = jnp.asarray(spots, jnp.int32)
    G = int(genes.shape[0])
    S = int(spots.shape[0])

    identity_sel = _is_identity(genes, n_genes) and _is_identity(spots, n_spots)
    if identity_sel:
        # Fast path: no gather at all -- the kernel streams log_rates/W/V
        # straight from HBM (no (C, G, S) write + re-read round-trip).
        lr_sel = log_rates.astype(jnp.float32)
        W_sel = W.astype(jnp.float32)
        V_sel = V.astype(jnp.float32)
    else:
        # TODO(synk): for scattered indices the (C, G, S) selection is still
        # materialized once in HBM; an in-kernel DMA gene-row gather + lane-axis
        # spot gather would remove that extra write+read.
        lr_sel = log_rates[:, genes[:, None], spots[None, :]].astype(jnp.float32)
        W_sel = W[:, :, spots].astype(jnp.float32)
        V_sel = V[:, genes, :].astype(jnp.float32)

    # ---- generation-aware tiling / VMEM budgeting ------------------------
    cap = _tpu_vmem_capacity()
    vmem_budget = int(cap * 0.8)                     # headroom (esp. v7x 64 MiB)
    fused_threshold = 40 * _MIB if cap <= 64 * _MIB else 88 * _MIB

    tg = _pick_tile(G, 8, tg_max)        # tg_max must be a multiple of 8
    ts = _pick_tile(S, 128, ts_max)      # ts_max must be a multiple of 128

    # v7x (2 TCs per chip, <=64 MiB VMEM): ensure >=2 parallel blocks.
    if cap <= 64 * _MIB:
        for _ in range(4):
            if pl.cdiv(G, tg) * pl.cdiv(S, ts) >= 2:
                break
            if ts >= 256:
                ts = _round_up(ts // 2, 128)
            elif tg >= 16:
                tg = _round_up(tg // 2, 8)
            else:
                break

    lr_buffers = 3    # deeper pipeline on the only large per-step stream (c-grid)
    fused_need, cgrid_need = _vmem_needs(C, P, tg, ts, lr_buffers)
    for _ in range(16):                  # shrink tiles if even c-grid overflows
        if cgrid_need <= vmem_budget:
            break
        if ts > 128:
            ts = max(128, _round_up(ts // 2, 128))
        elif tg > 8:
            tg = max(8, _round_up(tg // 2, 8))
        else:
            break
        fused_need, cgrid_need = _vmem_needs(C, P, tg, ts, lr_buffers)

    if force_c_grid is None:
        use_c_grid = fused_need > min(fused_threshold, vmem_budget)
    else:
        use_c_grid = bool(force_c_grid)

    need = cgrid_need if use_c_grid else fused_need
    vmem_limit = int(min(vmem_budget, max(need + 8 * _MIB, 32 * _MIB)))

    grid_g = pl.cdiv(G, tg)
    grid_s = pl.cdiv(S, ts)

    # ---- pallas_call ------------------------------------------------------
    if not use_c_grid:
        unroll = C if C <= 4 else 2
        kernel = functools.partial(_stp_kernel_fused_c, unroll=unroll)
        out = pl.pallas_call(
            kernel,
            out_shape=jax.ShapeDtypeStruct((G, S), jnp.float32),
            grid_spec=pltpu.PrefetchScalarGridSpec(
                num_scalar_prefetch=0,
                grid=(grid_g, grid_s),
                in_specs=[
                    pl.BlockSpec((C, tg, P), lambda i, j: (0, i, 0)),    # V
                    pl.BlockSpec((C, P, ts), lambda i, j: (0, 0, j)),    # W
                    pl.BlockSpec((C, tg, ts), lambda i, j: (0, i, j)),   # log-rates
                ],
                out_specs=pl.BlockSpec((tg, ts), lambda i, j: (i, j)),
            ),
            compiler_params=pltpu.CompilerParams(
                dimension_semantics=("parallel", "parallel"),
                vmem_limit_bytes=vmem_limit),
        )(V_sel, W_sel, lr_sel)
    else:
        lr_idx = lambda i, j, c: (c, i, j)
        try:
            lr_spec = pl.BlockSpec((1, tg, ts), lr_idx,
                                   pipeline_mode=pl.Buffered(lr_buffers))
        except Exception:
            lr_spec = pl.BlockSpec((1, tg, ts), lr_idx)
        out = pl.pallas_call(
            _stp_kernel_c_grid,
            out_shape=jax.ShapeDtypeStruct((G, S), jnp.float32),
            grid_spec=pltpu.PrefetchScalarGridSpec(
                num_scalar_prefetch=0,
                grid=(grid_g, grid_s, C),
                in_specs=[
                    pl.BlockSpec((1, tg, P), lambda i, j, c: (c, i, 0)),    # V
                    pl.BlockSpec((1, P, ts), lambda i, j, c: (c, 0, j)),    # W
                    lr_spec,                                                # log-rates
                ],
                out_specs=pl.BlockSpec((tg, ts), lambda i, j, c: (i, j)),
            ),
            compiler_params=pltpu.CompilerParams(
                dimension_semantics=("parallel", "parallel", "arbitrary"),
                vmem_limit_bytes=vmem_limit),
        )(V_sel, W_sel, lr_sel)

    return out


def _reference(log_rates, W, V, spots, genes):
    """Pure-jnp transcription of the PyTorch forward, for verification."""
    lr = log_rates[:, genes][..., spots]                                   # (C, G, S)
    prod = (W[:, None, :, :][..., spots] * V[:, genes, :, None]).sum(axis=2)
    return jnp.exp(lr + prod).sum(axis=0)                                  # (G, S)


if __name__ == "__main__":
    n_cell_types = 4
    n_programs = 8
    n_genes = 32
    n_spots = 64

    key = jax.random.PRNGKey(0)
    k_lr, k_w, k_v = jax.random.split(key, 3)

    log_rates = jax.random.normal(
        k_lr, (n_cell_types, n_genes, n_spots), dtype=jnp.float32)
    # Parameters: N(0, 0.01), as in the module's __init__.
    W = 0.01 * jax.random.normal(
        k_w, (n_cell_types, n_programs, n_spots), dtype=jnp.float32)
    V = 0.01 * jax.random.normal(
        k_v, (n_cell_types, n_genes, n_programs), dtype=jnp.float32)

    # Scattered (strided) selection -> gather path, fused-C kernel.
    genes = jnp.arange(0, n_genes, 4, dtype=jnp.int32)   # G = 8
    spots = jnp.arange(0, n_spots, 4, dtype=jnp.int32)   # S = 16

    ref = jax.block_until_ready(_reference(log_rates, W, V, spots, genes))

    out = jax.block_until_ready(
        spatial_programs_forward(log_rates, W, V, spots, genes))
    assert out.shape == (genes.shape[0], spots.shape[0])
    assert jnp.allclose(out, ref, rtol=1e-4, atol=1e-4), "fused-C gather path mismatch"

    # Large-problem path: C on the grid, resident-output accumulation, Buffered(3).
    out_cg = jax.block_until_ready(
        spatial_programs_forward(log_rates, W, V, spots, genes, force_c_grid=True))
    assert jnp.allclose(out_cg, ref, rtol=1e-4, atol=1e-4), "C-grid path mismatch"

    # Identity selection -> zero-gather fast path (log_rates streamed directly).
    genes_all = jnp.arange(n_genes, dtype=jnp.int32)
    spots_all = jnp.arange(n_spots, dtype=jnp.int32)
    ref_all = jax.block_until_ready(_reference(log_rates, W, V, spots_all, genes_all))
    out_all = jax.block_until_ready(
        spatial_programs_forward(log_rates, W, V, spots_all, genes_all))
    assert jnp.allclose(out_all, ref_all, rtol=1e-4, atol=1e-4), "identity fast path mismatch"

    print("KERNEL_OK")
</pallas_src>

<mosaic_0001>
module attributes {stable_mosaic.version = 11 : i64} {
  func.func @_stp_kernel_fused_c(%arg0: i32, %arg1: i32, %arg2: memref<4x8x8xf32, #tpu.memory_space<vmem>>, %arg3: memref<4x8x16xf32, #tpu.memory_space<vmem>>, %arg4: memref<4x8x16xf32, #tpu.memory_space<vmem>>, %arg5: memref<8x16xf32, #tpu.memory_space<vmem>>) attributes {dimension_semantics = [#tpu.dimension_semantics<parallel>, #tpu.dimension_semantics<parallel>], iteration_bounds = array<i64: 1, 1>, scalar_prefetch = 0 : i64, scratch_operands = 0 : i64, tpu.core_type = #tpu.core_type<tc>, window_params = [{transform_indices = @transform_0, window_bounds = array<i64: 4, 8, 8>}, {transform_indices = @transform_1, window_bounds = array<i64: 4, 8, 16>}, {transform_indices = @transform_2, window_bounds = array<i64: 4, 8, 16>}, {transform_indices = @transform_3, window_bounds = array<i64: 8, 16>}]} {
    %cst = arith.constant 0.000000e+00 : f32
    %0 = vector.broadcast %cst : f32 to vector<8x16xf32>
    %c0_i32 = arith.constant 0 : i32
    %1 = arith.index_cast %c0_i32 : i32 to index
    %c0 = arith.constant 0 : index
    %c0_0 = arith.constant 0 : index
    %2 = vector.load %arg2[%1, %c0, %c0_0] : memref<4x8x8xf32, #tpu.memory_space<vmem>>, vector<1x8x8xf32>
    %3 = vector.shape_cast %2 : vector<1x8x8xf32> to vector<8x8xf32>
    %4 = arith.index_cast %c0_i32 : i32 to index
    %c0_1 = arith.constant 0 : index
    %c0_2 = arith.constant 0 : index
    %5 = vector.load %arg3[%4, %c0_1, %c0_2] : memref<4x8x16xf32, #tpu.memory_space<vmem>>, vector<1x8x16xf32>
    %6 = vector.shape_cast %5 : vector<1x8x16xf32> to vector<8x16xf32>
    %cst_3 = arith.constant dense<0.000000e+00> : vector<8x16xf32>
    %7 = tpu.matmul %3, %6, %cst_3 {dimension_numbers = #tpu.dot_dimension_numbers<[1], [0], [0], [1], [0, 0, 1, 1], [], []>, precision = #tpu.contract_precision<fp32>} : vector<8x8xf32>, vector<8x16xf32>, vector<8x16xf32> -> vector<8x16xf32>
    %8 = arith.index_cast %c0_i32 : i32 to index
    %c0_4 = arith.constant 0 : index
    %c0_5 = arith.constant 0 : index
    %9 = vector.load %arg4[%8, %c0_4, %c0_5] : memref<4x8x16xf32, #tpu.memory_space<vmem>>, vector<1x8x16xf32>
    %10 = vector.shape_cast %9 : vector<1x8x16xf32> to vector<8x16xf32>
    %11 = arith.addf %10, %7 : vector<8x16xf32>
    %12 = math.exp %11 : vector<8x16xf32>
    %13 = arith.addf %0, %12 : vector<8x16xf32>
    %c1_i32 = arith.constant 1 : i32
    %14 = arith.index_cast %c1_i32 : i32 to index
    %c0_6 = arith.constant 0 : index
    %c0_7 = arith.constant 0 : index
    %15 = vector.load %arg2[%14, %c0_6, %c0_7] : memref<4x8x8xf32, #tpu.memory_space<vmem>>, vector<1x8x8xf32>
    %16 = vector.shape_cast %15 : vector<1x8x8xf32> to vector<8x8xf32>
    %17 = arith.index_cast %c1_i32 : i32 to index
    %c0_8 = arith.constant 0 : index
    %c0_9 = arith.constant 0 : index
    %18 = vector.load %arg3[%17, %c0_8, %c0_9] : memref<4x8x16xf32, #tpu.memory_space<vmem>>, vector<1x8x16xf32>
    %19 = vector.shape_cast %18 : vector<1x8x16xf32> to vector<8x16xf32>
    %cst_10 = arith.constant dense<0.000000e+00> : vector<8x16xf32>
    %20 = tpu.matmul %16, %19, %cst_10 {dimension_numbers = #tpu.dot_dimension_numbers<[1], [0], [0], [1], [0, 0, 1, 1], [], []>, precision = #tpu.contract_precision<fp32>} : vector<8x8xf32>, vector<8x16xf32>, vector<8x16xf32> -> vector<8x16xf32>
    %21 = arith.index_cast %c1_i32 : i32 to index
    %c0_11 = arith.constant 0 : index
    %c0_12 = arith.constant 0 : index
    %22 = vector.load %arg4[%21, %c0_11, %c0_12] : memref<4x8x16xf32, #tpu.memory_space<vmem>>, vector<1x8x16xf32>
    %23 = vector.shape_cast %22 : vector<1x8x16xf32> to vector<8x16xf32>
    %24 = arith.addf %23, %20 : vector<8x16xf32>
    %25 = math.exp %24 : vector<8x16xf32>
    %26 = arith.addf %13, %25 : vector<8x16xf32>
    %c2_i32 = arith.constant 2 : i32
    %27 = arith.index_cast %c2_i32 : i32 to index
    %c0_13 = arith.constant 0 : index
    %c0_14 = arith.constant 0 : index
    %28 = vector.load %arg2[%27, %c0_13, %c0_14] : memref<4x8x8xf32, #tpu.memory_space<vmem>>, vector<1x8x8xf32>
    %29 = vector.shape_cast %28 : vector<1x8x8xf32> to vector<8x8xf32>
    %30 = arith.index_cast %c2_i32 : i32 to index
    %c0_15 = arith.constant 0 : index
    %c0_16 = arith.constant 0 : index
    %31 = vector.load %arg3[%30, %c0_15, %c0_16] : memref<4x8x16xf32, #tpu.memory_space<vmem>>, vector<1x8x16xf32>
    %32 = vector.shape_cast %31 : vector<1x8x16xf32> to vector<8x16xf32>
    %cst_17 = arith.constant dense<0.000000e+00> : vector<8x16xf32>
    %33 = tpu.matmul %29, %32, %cst_17 {dimension_numbers = #tpu.dot_dimension_numbers<[1], [0], [0], [1], [0, 0, 1, 1], [], []>, precision = #tpu.contract_precision<fp32>} : vector<8x8xf32>, vector<8x16xf32>, vector<8x16xf32> -> vector<8x16xf32>
    %34 = arith.index_cast %c2_i32 : i32 to index
    %c0_18 = arith.constant 0 : index
    %c0_19 = arith.constant 0 : index
    %35 = vector.load %arg4[%34, %c0_18, %c0_19] : memref<4x8x16xf32, #tpu.memory_space<vmem>>, vector<1x8x16xf32>
    %36 = vector.shape_cast %35 : vector<1x8x16xf32> to vector<8x16xf32>
    %37 = arith.addf %36, %33 : vector<8x16xf32>
    %38 = math.exp %37 : vector<8x16xf32>
    %39 = arith.addf %26, %38 : vector<8x16xf32>
    %c3_i32 = arith.constant 3 : i32
    %40 = arith.index_cast %c3_i32 : i32 to index
    %c0_20 = arith.constant 0 : index
    %c0_21 = arith.constant 0 : index
    %41 = vector.load %arg2[%40, %c0_20, %c0_21] : memref<4x8x8xf32, #tpu.memory_space<vmem>>, vector<1x8x8xf32>
    %42 = vector.shape_cast %41 : vector<1x8x8xf32> to vector<8x8xf32>
    %43 = arith.index_cast %c3_i32 : i32 to index
    %c0_22 = arith.constant 0 : index
    %c0_23 = arith.constant 0 : index
    %44 = vector.load %arg3[%43, %c0_22, %c0_23] : memref<4x8x16xf32, #tpu.memory_space<vmem>>, vector<1x8x16xf32>
    %45 = vector.shape_cast %44 : vector<1x8x16xf32> to vector<8x16xf32>
    %cst_24 = arith.constant dense<0.000000e+00> : vector<8x16xf32>
    %46 = tpu.matmul %42, %45, %cst_24 {dimension_numbers = #tpu.dot_dimension_numbers<[1], [0], [0], [1], [0, 0, 1, 1], [], []>, precision = #tpu.contract_precision<fp32>} : vector<8x8xf32>, vector<8x16xf32>, vector<8x16xf32> -> vector<8x16xf32>
    %47 = arith.index_cast %c3_i32 : i32 to index
    %c0_25 = arith.constant 0 : index
    %c0_26 = arith.constant 0 : index
    %48 = vector.load %arg4[%47, %c0_25, %c0_26] : memref<4x8x16xf32, #tpu.memory_space<vmem>>, vector<1x8x16xf32>
    %49 = vector.shape_cast %48 : vector<1x8x16xf32> to vector<8x16xf32>
    %50 = arith.addf %49, %46 : vector<8x16xf32>
    %51 = math.exp %50 : vector<8x16xf32>
    %52 = arith.addf %39, %51 : vector<8x16xf32>
    %c4_i32 = arith.constant 4 : i32
    %c0_27 = arith.constant 0 : index
    %c0_28 = arith.constant 0 : index
    %53 = vector.load %arg5[%c0_27, %c0_28] : memref<8x16xf32, #tpu.memory_space<vmem>>, vector<8x16xf32>
    tpu.vector_store %arg5[%c0_27, %c0_28], %52 {strides = array<i32>} : memref<8x16xf32, #tpu.memory_space<vmem>>, vector<8x16xf32>,
    return
  }
  func.func @transform_0(%arg0: i32, %arg1: i32) -> (i32, i32, i32) {
    %c0_i32 = arith.constant 0 : i32
    %c0_i32_0 = arith.constant 0 : i32
    %c0_i32_1 = arith.constant 0 : i32
    return %c0_i32, %arg0, %c0_i32_0 : i32, i32, i32
  }
  func.func @transform_1(%arg0: i32, %arg1: i32) -> (i32, i32, i32) {
    %c0_i32 = arith.constant 0 : i32
    %c0_i32_0 = arith.constant 0 : i32
    %c0_i32_1 = arith.constant 0 : i32
    return %c0_i32, %c0_i32_0, %arg1 : i32, i32, i32
  }
  func.func @transform_2(%arg0: i32, %arg1: i32) -> (i32, i32, i32) {
    %c0_i32 = arith.constant 0 : i32
    %c0_i32_0 = arith.constant 0 : i32
    return %c0_i32, %arg0, %arg1 : i32, i32, i32
  }
  func.func @transform_3(%arg0: i32, %arg1: i32) -> (i32, i32) {
    %c0_i32 = arith.constant 0 : i32
    return %arg0, %arg1 : i32, i32
  }
}

</mosaic_0001>

<llo_original>
// kernel: tpu_custom_call.1
$region0: #{tpu_custom_call.1}
  #allocation0 [shape = 'u32[]', space=smem, size = 0x4, offset = 0x4, fixed_abs, tag = 'smem constant byte address 0x4 - core index']
  #allocation1 [shape = 'u32[72,128]{1,0:T(1,128)}', space=vmem, size = 0x9000, scoped, tag = 'internal scratch']
  %s0 = inlined_call_operand.hbm [shape: f32[4,8,8], index: 0, kind: input, shape index: {}]
  %s1 = inlined_call_operand.hbm [shape: f32[4,8,16], index: 1, kind: input, shape index: {}]
  %s2 = inlined_call_operand.hbm [shape: f32[4,8,16], index: 2, kind: input, shape index: {}]
  %s3 = inlined_call_operand.hbm [shape: f32[8,16], index: 3, kind: output, shape index: {}]
  %s4 = sld [smem:[#allocation0]]
  $region34: #{tpu_custom_call.1} parent=0
    _
  %s6 = ssub.s32 1, %s4
  %s7 = scalar_select 0, %s6, %s4
  $region1: #{tpu_custom_call.1} parent=0
    #allocation2 [shape = 'u8[16384]{0}', space=vmem, size = 0x4000, scoped, tag = 'input window, operand 0, single buffered']
    #allocation3 [shape = 's32[1]{0}', space=sflag, size = 0x4, scoped, tag = 'scoped memory for tpu_custom_call.1']
    #allocation4 [shape = 's32[1]{0}', space=sflag, size = 0x4, scoped, tag = 'scoped memory for tpu_custom_call.1']
    #allocation5 [shape = 'u8[16384]{0}', space=vmem, size = 0x4000, scoped, tag = 'input window, operand 1, single buffered']
    #allocation6 [shape = 's32[1]{0}', space=sflag, size = 0x4, scoped, tag = 'scoped memory for tpu_custom_call.1']
    #allocation7 [shape = 'u8[16384]{0}', space=vmem, size = 0x4000, scoped, tag = 'input window, operand 2, single buffered']
    #allocation8 [shape = 'u8[4096]{0}', space=vmem, size = 0x1000, scoped, tag = 'output window, operand 0, single buffered']
    %8 = vsyncpa [#allocation3], 0
    %9 = vsyncpa [#allocation6], 0
    %10 = vsyncpa [#allocation4], 0
    // Predicated region
    $region2: #{tpu_custom_call.1} parent=1 // pred_check
      _
    $region3: #{tpu_custom_call.1} parent=1 // pred_check_branch
      %12 = sbr.rel (0) target = $region5
    $region4: #{tpu_custom_call.1} parent=1 // pred_region
      %14 = vsyncadd [#allocation3], 0
      %s15 = sshll.u32 %s0, 4
      %s16 = int_to_ptr.hbm [resolvable:$true] %s15
      %s17 = sshll.u32 [#allocation2], 4
      %s18 = int_to_ptr.vmem [resolvable:$true] %s17
      %23 = dma.hbm_to_vmem [thread:$0]  %s16, 512, %s18, [#allocation3], 128, 128, 8
    $region5: #{tpu_custom_call.1} parent=1 // pred_fallthru
      _
    // Predicated region
    $region6: #{tpu_custom_call.1} parent=1 // pred_check
      _
    $region7: #{tpu_custom_call.1} parent=1 // pred_check_branch
      %25 = sbr.rel (0) target = $region9
    $region8: #{tpu_custom_call.1} parent=1 // pred_region
      %27 = vsyncadd [#allocation6], 0
      %s28 = sshll.u32 %s1, 4
      %s29 = int_to_ptr.hbm [resolvable:$true] %s28
      %s30 = sshll.u32 [#allocation5], 4
      %s31 = int_to_ptr.vmem [resolvable:$true] %s30
      %36 = dma.hbm_to_vmem [thread:$0]  %s29, 512, %s31, [#allocation6], 128, 128, 8
    $region9: #{tpu_custom_call.1} parent=1 // pred_fallthru
      _
    // Predicated region
    $region10: #{tpu_custom_call.1} parent=1 // pred_check
      _
    $region11: #{tpu_custom_call.1} parent=1 // pred_check_branch
      %38 = sbr.rel (0) target = $region13
    $region12: #{tpu_custom_call.1} parent=1 // pred_region
      %40 = vsyncadd [#allocation6], 0
      %s41 = sshll.u32 %s2, 4
      %s42 = int_to_ptr.hbm [resolvable:$true] %s41
      %s43 = sshll.u32 [#allocation7], 4
      %s44 = int_to_ptr.vmem [resolvable:$true] %s43
      %49 = dma.hbm_to_vmem [thread:$0]  %s42, 512, %s44, [#allocation6], 128, 128, 8
    $region13: #{tpu_custom_call.1} parent=1 // pred_fallthru
      _
    // Predicated region
    $region14: #{tpu_custom_call.1} parent=1 // pred_check
      _
    $region15: #{tpu_custom_call.1} parent=1 // pred_check_branch
      %51 = sbr.rel (0) target = $region17
    $region16: #{tpu_custom_call.1} parent=1 // pred_region
      %53 = dma.done [#allocation3], 512
    $region17: #{tpu_custom_call.1} parent=1 // pred_fallthru
      _
    // Predicated region
    $region18: #{tpu_custom_call.1} parent=1 // pred_check
      _
    $region19: #{tpu_custom_call.1} parent=1 // pred_check_branch
      %55 = sbr.rel (0) target = $region21
    $region20: #{tpu_custom_call.1} parent=1 // pred_region
      %57 = dma.done [#allocation6], 512
    $region21: #{tpu_custom_call.1} parent=1 // pred_fallthru
      _
    // Predicated region
    $region22: #{tpu_custom_call.1} parent=1 // pred_check
      _
    $region23: #{tpu_custom_call.1} parent=1 // pred_check_branch
      %59 = sbr.rel (0) target = $region25
    $region24: #{tpu_custom_call.1} parent=1 // pred_region
      %61 = dma.done [#allocation6], 512
    $region25: #{tpu_custom_call.1} parent=1 // pred_fallthru
      _
    %v62 = vld [vmem:[#allocation2] sm:$0xff]
    %v63 = vld [vmem:[#allocation5] sm:$0xff]
    %vm64 = vcmask 64512
    %v66 = vsel %vm64, %v62, 0
    %68 = vmatpush.msra.mxu0 0.0
    %69 = vmatpush.msra.mxu0 0.0
    %70 = vmatpush.msra.mxu0 0.0
    %71 = vmatpush.msra.mxu0 0.0
    %72 = vmatpush.msra.mxu0 0.0
    %73 = vmatpush.msra.mxu0 0.0
    %74 = vmatpush.msra.mxu0 0.0
    %75 = vmatpush.msra.mxu0 0.0
    %76 = vmatpush.msra.mxu0 0.0
    %77 = vmatpush.msra.mxu0 0.0
    %78 = vmatpush.msra.mxu0 0.0
    %79 = vmatpush.msra.mxu0 0.0
    %80 = vmatpush.msra.mxu0 0.0
    %81 = vmatpush.msra.mxu0 0.0
    %82 = vmatpush.msra.mxu0 0.0
    %v83 = vand.u32 %v63, 4294901760
    %84 = vmatpush.msra.mxu0 %v83
    %v85 = vand.u32 %v66, 4294901760
    %v86 = vsub.f32 %v66, %v85
    %v87 = vand.u32 %v86, 4294901760
    %v88 = vsub.f32 %v86, %v87
    %v89 = vand.u32 %v88, 4294901760
    %90 = vmatmul.f32.gmra.mxu0 %v89
    %v91 = vpop.f32.mrf.mxu0
    %v92 = vadd.f32 0.0, %v91
    %93 = vdwg.mxu0
    %94 = vmatpush.msra.mxu0 0.0
    %95 = vmatpush.msra.mxu0 0.0
    %96 = vmatpush.msra.mxu0 0.0
    %97 = vmatpush.msra.mxu0 0.0
    %98 = vmatpush.msra.mxu0 0.0
    %99 = vmatpush.msra.mxu0 0.0
    %100 = vmatpush.msra.mxu0 0.0
    %101 = vmatpush.msra.mxu0 0.0
    %102 = vmatpush.msra.mxu0 0.0
    %103 = vmatpush.msra.mxu0 0.0
    %104 = vmatpush.msra.mxu0 0.0
    %105 = vmatpush.msra.mxu0 0.0
    %106 = vmatpush.msra.mxu0 0.0
    %107 = vmatpush.msra.mxu0 0.0
    %108 = vmatpush.msra.mxu0 0.0
    %v109 = vand.u32 %v63, 4294901760
    %v110 = vsub.f32 %v63, %v109
    %v111 = vand.u32 %v110, 4294901760
    %v112 = vsub.f32 %v110, %v111
    %v113 = vand.u32 %v112, 4294901760
    %114 = vmatpush.msra.mxu0 %v113
    %v115 = vand.u32 %v66, 4294901760
    %116 = vmatmul.f32.gmra.mxu0 %v115
    %v117 = vpop.f32.mrf.mxu0
    %v118 = vadd.f32 %v92, %v117
    %119 = vdwg.mxu0
    %120 = vmatpush.msra.mxu0 0.0
    %121 = vmatpush.msra.mxu0 0.0
    %122 = vmatpush.msra.mxu0 0.0
    %123 = vmatpush.msra.mxu0 0.0
    %124 = vmatpush.msra.mxu0 0.0
    %125 = vmatpush.msra.mxu0 0.0
    %126 = vmatpush.msra.mxu0 0.0
    %127 = vmatpush.msra.mxu0 0.0
    %128 = vmatpush.msra.mxu0 0.0
    %129 = vmatpush.msra.mxu0 0.0
    %130 = vmatpush.msra.mxu0 0.0
    %131 = vmatpush.msra.mxu0 0.0
    %132 = vmatpush.msra.mxu0 0.0
    %133 = vmatpush.msra.mxu0 0.0
    %134 = vmatpush.msra.mxu0 0.0
    %v135 = vand.u32 %v63, 4294901760
    %v136 = vsub.f32 %v63, %v135
    %137 = vmatpush.msra.mxu0 %v136
    %v138 = vand.u32 %v66, 4294901760
    %v139 = vsub.f32 %v66, %v138
    %140 = vmatmul.f32.gmra.mxu0 %v139
    %v141 = vpop.f32.mrf.mxu0
    %v142 = vadd.f32 %v118, %v141
    %143 = vdwg.mxu0
    %144 = vmatpush.msra.mxu0 0.0
    %145 = vmatpush.msra.mxu0 0.0
    %146 = vmatpush.msra.mxu0 0.0
    %147 = vmatpush.msra.mxu0 0.0
    %148 = vmatpush.msra.mxu0 0.0
    %149 = vmatpush.msra.mxu0 0.0
    %150 = vmatpush.msra.mxu0 0.0
    %151 = vmatpush.msra.mxu0 0.0
    %152 = vmatpush.msra.mxu0 0.0
    %153 = vmatpush.msra.mxu0 0.0
    %154 = vmatpush.msra.mxu0 0.0
    %155 = vmatpush.msra.mxu0 0.0
    %156 = vmatpush.msra.mxu0 0.0
    %157 = vmatpush.msra.mxu0 0.0
    %158 = vmatpush.msra.mxu0 0.0
    %v159 = vand.u32 %v63, 4294901760
    %160 = vmatpush.msra.mxu0 %v159
    %v161 = vand.u32 %v66, 4294901760
    %v162 = vsub.f32 %v66, %v161
    %v163 = vand.u32 %v162, 4294901760
    %164 = vmatmul.f32.gmra.mxu0 %v163
    %v165 = vpop.f32.mrf.mxu0
    %v166 = vadd.f32 %v142, %v165
    %167 = vdwg.mxu0
    %168 = vmatpush.msra.mxu0 0.0
    %169 = vmatpush.msra.mxu0 0.0
    %170 = vmatpush.msra.mxu0 0.0
    %171 = vmatpush.msra.mxu0 0.0
    %172 = vmatpush.msra.mxu0 0.0
    %173 = vmatpush.msra.mxu0 0.0
    %174 = vmatpush.msra.mxu0 0.0
    %175 = vmatpush.msra.mxu0 0.0
    %176 = vmatpush.msra.mxu0 0.0
    %177 = vmatpush.msra.mxu0 0.0
    %178 = vmatpush.msra.mxu0 0.0
    %179 = vmatpush.msra.mxu0 0.0
    %180 = vmatpush.msra.mxu0 0.0
    %181 = vmatpush.msra.mxu0 0.0
    %182 = vmatpush.msra.mxu0 0.0
    %v183 = vand.u32 %v63, 4294901760
    %v184 = vsub.f32 %v63, %v183
    %v185 = vand.u32 %v184, 4294901760
    %186 = vmatpush.msra.mxu0 %v185
    %v187 = vand.u32 %v66, 4294901760
    %188 = vmatmul.f32.gmra.mxu0 %v187
    %v189 = vpop.f32.mrf.mxu0
    %v190 = vadd.f32 %v166, %v189
    %191 = vdwg.mxu0
    %192 = vmatpush.msra.mxu0 0.0
    %193 = vmatpush.msra.mxu0 0.0
    %194 = vmatpush.msra.mxu0 0.0
    %195 = vmatpush.msra.mxu0 0.0
    %196 = vmatpush.msra.mxu0 0.0
    %197 = vmatpush.msra.mxu0 0.0
    %198 = vmatpush.msra.mxu0 0.0
    %199 = vmatpush.msra.mxu0 0.0
    %200 = vmatpush.msra.mxu0 0.0
    %201 = vmatpush.msra.mxu0 0.0
    %202 = vmatpush.msra.mxu0 0.0
    %203 = vmatpush.msra.mxu0 0.0
    %204 = vmatpush.msra.mxu0 0.0
    %205 = vmatpush.msra.mxu0 0.0
    %206 = vmatpush.msra.mxu0 0.0
    %v207 = vand.u32 %v63, 4294901760
    %208 = vmatpush.msra.mxu0 %v207
    %v209 = vand.u32 %v66, 4294901760
    %210 = vmatmul.f32.gmra.mxu0 %v209
    %v211 = vpop.f32.mrf.mxu0
    %v212 = vadd.f32 %v190, %v211
    %213 = vdwg.mxu0
    %v214 = vld [vmem:[#allocation7] sm:$0xff]
    %v215 = vadd.f32 %v214, %v212
    %v216 = vmul.f32 %v215, 1.442695
    %v217 = vpow.pop %v216
    %v218 = vadd.f32 %v217, 0.0
    %s219 = scalar_lea.vmem [#allocation2], 8
    %v220 = vld [vmem:[%s219] sm:$0xff]
    %s221 = scalar_lea.vmem [#allocation5], 8
    %v222 = vld [vmem:[%s221] sm:$0xff]
    %v224 = vsel %vm64, %v220, 0
    %226 = vmatpush.msra.mxu0 0.0
    %227 = vmatpush.msra.mxu0 0.0
    %228 = vmatpush.msra.mxu0 0.0
    %229 = vmatpush.msra.mxu0 0.0
    %230 = vmatpush.msra.mxu0 0.0
    %231 = vmatpush.msra.mxu0 0.0
    %232 = vmatpush.msra.mxu0 0.0
    %233 = vmatpush.msra.mxu0 0.0
    %234 = vmatpush.msra.mxu0 0.0
    %235 = vmatpush.msra.mxu0 0.0
    %236 = vmatpush.msra.mxu0 0.0
    %237 = vmatpush.msra.mxu0 0.0
    %238 = vmatpush.msra.mxu0 0.0
    %239 = vmatpush.msra.mxu0 0.0
    %240 = vmatpush.msra.mxu0 0.0
    %v241 = vand.u32 %v222, 4294901760
    %242 = vmatpush.msra.mxu0 %v241
    %v243 = vand.u32 %v224, 4294901760
    %v244 = vsub.f32 %v224, %v243
    %v245 = vand.u32 %v244, 4294901760
    %v246 = vsub.f32 %v244, %v245
    %v247 = vand.u32 %v246, 4294901760
    %248 = vmatmul.f32.gmra.mxu0 %v247
    %v249 = vpop.f32.mrf.mxu0
    %v250 = vadd.f32 0.0, %v249
    %251 = vdwg.mxu0
    %252 = vmatpush.msra.mxu0 0.0
    %253 = vmatpush.msra.mxu0 0.0
    %254 = vmatpush.msra.mxu0 0.0
    %255 = vmatpush.msra.mxu0 0.0
    %256 = vmatpush.msra.mxu0 0.0
    %257 = vmatpush.msra.mxu0 0.0
    %258 = vmatpush.msra.mxu0 0.0
    %259 = vmatpush.msra.mxu0 0.0
    %260 = vmatpush.msra.mxu0 0.0
    %261 = vmatpush.msra.mxu0 0.0
    %262 = vmatpush.msra.mxu0 0.0
    %263 = vmatpush.msra.mxu0 0.0
    %264 = vmatpush.msra.mxu0 0.0
    %265 = vmatpush.msra.mxu0 0.0
    %266 = vmatpush.msra.mxu0 0.0
    %v267 = vand.u32 %v222, 4294901760
    %v268 = vsub.f32 %v222, %v267
    %v269 = vand.u32 %v268, 4294901760
    %v270 = vsub.f32 %v268, %v269
    %v271 = vand.u32 %v270, 4294901760
    %272 = vmatpush.msra.mxu0 %v271
    %v273 = vand.u32 %v224, 4294901760
    %274 = vmatmul.f32.gmra.mxu0 %v273
    %v275 = vpop.f32.mrf.mxu0
    %v276 = vadd.f32 %v250, %v275
    %277 = vdwg.mxu0
    %278 = vmatpush.msra.mxu0 0.0
    %279 = vmatpush.msra.mxu0 0.0
    %280 = vmatpush.msra.mxu0 0.0
    %281 = vmatpush.msra.mxu0 0.0
    %282 = vmatpush.msra.mxu0 0.0
    %283 = vmatpush.msra.mxu0 0.0
    %284 = vmatpush.msra.mxu0 0.0
    %285 = vmatpush.msra.mxu0 0.0
    %286 = vmatpush.msra.mxu0 0.0
    %287 = vmatpush.msra.mxu0 0.0
    %288 = vmatpush.msra.mxu0 0.0
    %289 = vmatpush.msra.mxu0 0.0
    %290 = vmatpush.msra.mxu0 0.0
    %291 = vmatpush.msra.mxu0 0.0
    %292 = vmatpush.msra.mxu0 0.0
    %v293 = vand.u32 %v222, 4294901760
    %v294 = vsub.f32 %v222, %v293
    %295 = vmatpush.msra.mxu0 %v294
    %v296 = vand.u32 %v224, 4294901760
    %v297 = vsub.f32 %v224, %v296
    %298 = vmatmul.f32.gmra.mxu0 %v297
    %v299 = vpop.f32.mrf.mxu0
    %v300 = vadd.f32 %v276, %v299
    %301 = vdwg.mxu0
    %302 = vmatpush.msra.mxu0 0.0
    %303 = vmatpush.msra.mxu0 0.0
    %304 = vmatpush.msra.mxu0 0.0
    %305 = vmatpush.msra.mxu0 0.0
    %306 = vmatpush.msra.mxu0 0.0
    %307 = vmatpush.msra.mxu0 0.0
    %308 = vmatpush.msra.mxu0 0.0
    %309 = vmatpush.msra.mxu0 0.0
    %310 = vmatpush.msra.mxu0 0.0
    %311 = vmatpush.msra.mxu0 0.0
    %312 = vmatpush.msra.mxu0 0.0
    %313 = vmatpush.msra.mxu0 0.0
    %314 = vmatpush.msra.mxu0 0.0
    %315 = vmatpush.msra.mxu0 0.0
    %316 = vmatpush.msra.mxu0 0.0
    %v317 = vand.u32 %v222, 4294901760
    %318 = vmatpush.msra.mxu0 %v317
    %v319 = vand.u32 %v224, 4294901760
    %v320 = vsub.f32 %v224, %v319
    %v321 = vand.u32 %v320, 4294901760
    %322 = vmatmul.f32.gmra.mxu0 %v321
    %v323 = vpop.f32.mrf.mxu0
    %v324 = vadd.f32 %v300, %v323
    %325 = vdwg.mxu0
    %326 = vmatpush.msra.mxu0 0.0
    %327 = vmatpush.msra.mxu0 0.0
    %328 = vmatpush.msra.mxu0 0.0
    %329 = vmatpush.msra.mxu0 0.0
    %330 = vmatpush.msra.mxu0 0.0
    %331 = vmatpush.msra.mxu0 0.0
    %332 = vmatpush.msra.mxu0 0.0
    %333 = vmatpush.msra.mxu0 0.0
    %334 = vmatpush.msra.mxu0 0.0
    %335 = vmatpush.msra.mxu0 0.0
    %336 = vmatpush.msra.mxu0 0.0
    %337 = vmatpush.msra.mxu0 0.0
    %338 = vmatpush.msra.mxu0 0.0
    %339 = vmatpush.msra.mxu0 0.0
    %340 = vmatpush.msra.mxu0 0.0
    %v341 = vand.u32 %v222, 4294901760
    %v342 = vsub.f32 %v222, %v341
    %v343 = vand.u32 %v342, 4294901760
    %344 = vmatpush.msra.mxu0 %v343
    %v345 = vand.u32 %v224, 4294901760
    %346 = vmatmul.f32.gmra.mxu0 %v345
    %v347 = vpop.f32.mrf.mxu0
    %v348 = vadd.f32 %v324, %v347
    %349 = vdwg.mxu0
    %350 = vmatpush.msra.mxu0 0.0
    %351 = vmatpush.msra.mxu0 0.0
    %352 = vmatpush.msra.mxu0 0.0
    %353 = vmatpush.msra.mxu0 0.0
    %354 = vmatpush.msra.mxu0 0.0
    %355 = vmatpush.msra.mxu0 0.0
    %356 = vmatpush.msra.mxu0 0.0
    %357 = vmatpush.msra.mxu0 0.0
    %358 = vmatpush.msra.mxu0 0.0
    %359 = vmatpush.msra.mxu0 0.0
    %360 = vmatpush.msra.mxu0 0.0
    %361 = vmatpush.msra.mxu0 0.0
    %362 = vmatpush.msra.mxu0 0.0
    %363 = vmatpush.msra.mxu0 0.0
    %364 = vmatpush.msra.mxu0 0.0
    %v365 = vand.u32 %v222, 4294901760
    %366 = vmatpush.msra.mxu0 %v365
    %v367 = vand.u32 %v224, 4294901760
    %368 = vmatmul.f32.gmra.mxu0 %v367
    %v369 = vpop.f32.mrf.mxu0
    %v370 = vadd.f32 %v348, %v369
    %371 = vdwg.mxu0
    %s372 = scalar_lea.vmem [#allocation7], 8
    %v373 = vld [vmem:[%s372] sm:$0xff]
    %v374 = vadd.f32 %v373, %v370
    %v375 = vmul.f32 %v374, 1.442695
    %v376 = vpow.pop %v375
    %v377 = vadd.f32 %v218, %v376
    %s378 = scalar_lea.vmem [#allocation2], 16
    %v379 = vld [vmem:[%s378] sm:$0xff]
    %s380 = scalar_lea.vmem [#allocation5], 16
    %v381 = vld [vmem:[%s380] sm:$0xff]
    %v383 = vsel %vm64, %v379, 0
    %385 = vmatpush.msra.mxu0 0.0
    %386 = vmatpush.msra.mxu0 0.0
    %387 = vmatpush.msra.mxu0 0.0
    %388 = vmatpush.msra.mxu0 0.0
    %389 = vmatpush.msra.mxu0 0.0
    %390 = vmatpush.msra.mxu0 0.0
    %391 = vmatpush.msra.mxu0 0.0
    %392 = vmatpush.msra.mxu0 0.0
    %393 = vmatpush.msra.mxu0 0.0
    %394 = vmatpush.msra.mxu0 0.0
    %395 = vmatpush.msra.mxu0 0.0
    %396 = vmatpush.msra.mxu0 0.0
    %397 = vmatpush.msra.mxu0 0.0
    %398 = vmatpush.msra.mxu0 0.0
    %399 = vmatpush.msra.mxu0 0.0
    %v400 = vand.u32 %v381, 4294901760
    %401 = vmatpush.msra.mxu0 %v400
    %v402 = vand.u32 %v383, 4294901760
    %v403 = vsub.f32 %v383, %v402
    %v404 = vand.u32 %v403, 4294901760
    %v405 = vsub.f32 %v403, %v404
    %v406 = vand.u32 %v405, 4294901760
    %407 = vmatmul.f32.gmra.mxu0 %v406
    %v408 = vpop.f32.mrf.mxu0
    %v409 = vadd.f32 0.0, %v408
    %410 = vdwg.mxu0
    %411 = vmatpush.msra.mxu0 0.0
    %412 = vmatpush.msra.mxu0 0.0
    %413 = vmatpush.msra.mxu0 0.0
    %414 = vmatpush.msra.mxu0 0.0
    %415 = vmatpush.msra.mxu0 0.0
    %416 = vmatpush.msra.mxu0 0.0
    %417 = vmatpush.msra.mxu0 0.0
    %418 = vmatpush.msra.mxu0 0.0
    %419 = vmatpush.msra.mxu0 0.0
    %420 = vmatpush.msra.mxu0 0.0
    %421 = vmatpush.msra.mxu0 0.0
    %422 = vmatpush.msra.mxu0 0.0
    %423 = vmatpush.msra.mxu0 0.0
    %424 = vmatpush.msra.mxu0 0.0
    %425 = vmatpush.msra.mxu0 0.0
    %v426 = vand.u32 %v381, 4294901760
    %v427 = vsub.f32 %v381, %v426
    %v428 = vand.u32 %v427, 4294901760
    %v429 = vsub.f32 %v427, %v428
    %v430 = vand.u32 %v429, 4294901760
    %431 = vmatpush.msra.mxu0 %v430
    %v432 = vand.u32 %v383, 4294901760
    %433 = vmatmul.f32.gmra.mxu0 %v432
    %v434 = vpop.f32.mrf.mxu0
    %v435 = vadd.f32 %v409, %v434
    %436 = vdwg.mxu0
    %437 = vmatpush.msra.mxu0 0.0
    %438 = vmatpush.msra.mxu0 0.0
    %439 = vmatpush.msra.mxu0 0.0
    %440 = vmatpush.msra.mxu0 0.0
    %441 = vmatpush.msra.mxu0 0.0
    %442 = vmatpush.msra.mxu0 0.0
    %443 = vmatpush.msra.mxu0 0.0
    %444 = vmatpush.msra.mxu0 0.0
    %445 = vmatpush.msra.mxu0 0.0
    %446 = vmatpush.msra.mxu0 0.0
    %447 = vmatpush.msra.mxu0 0.0
    %448 = vmatpush.msra.mxu0 0.0
    %449 = vmatpush.msra.mxu0 0.0
    %450 = vmatpush.msra.mxu0 0.0
    %451 = vmatpush.msra.mxu0 0.0
    %v452 = vand.u32 %v381, 4294901760
    %v453 = vsub.f32 %v381, %v452
    %454 = vmatpush.msra.mxu0 %v453
    %v455 = vand.u32 %v383, 4294901760
    %v456 = vsub.f32 %v383, %v455
    %457 = vmatmul.f32.gmra.mxu0 %v456
    %v458 = vpop.f32.mrf.mxu0
    %v459 = vadd.f32 %v435, %v458
    %460 = vdwg.mxu0
    %461 = vmatpush.msra.mxu0 0.0
    %462 = vmatpush.msra.mxu0 0.0
    %463 = vmatpush.msra.mxu0 0.0
    %464 = vmatpush.msra.mxu0 0.0
    %465 = vmatpush.msra.mxu0 0.0
    %466 = vmatpush.msra.mxu0 0.0
    %467 = vmatpush.msra.mxu0 0.0
    %468 = vmatpush.msra.mxu0 0.0
    %469 = vmatpush.msra.mxu0 0.0
    %470 = vmatpush.msra.mxu0 0.0
    %471 = vmatpush.msra.mxu0 0.0
    %472 = vmatpush.msra.mxu0 0.0
    %473 = vmatpush.msra.mxu0 0.0
    %474 = vmatpush.msra.mxu0 0.0
    %475 = vmatpush.msra.mxu0 0.0
    %v476 = vand.u32 %v381, 4294901760
    %477 = vmatpush.msra.mxu0 %v476
    %v478 = vand.u32 %v383, 4294901760
    %v479 = vsub.f32 %v383, %v478
    %v480 = vand.u32 %v479, 4294901760
    %481 = vmatmul.f32.gmra.mxu0 %v480
    %v482 = vpop.f32.mrf.mxu0
    %v483 = vadd.f32 %v459, %v482
    %484 = vdwg.mxu0
    %485 = vmatpush.msra.mxu0 0.0
    %486 = vmatpush.msra.mxu0 0.0
    %487 = vmatpush.msra.mxu0 0.0
    %488 = vmatpush.msra.mxu0 0.0
    %489 = vmatpush.msra.mxu0 0.0
    %490 = vmatpush.msra.mxu0 0.0
    %491 = vmatpush.msra.mxu0 0.0
    %492 = vmatpush.msra.mxu0 0.0
    %493 = vmatpush.msra.mxu0 0.0
    %494 = vmatpush.msra.mxu0 0.0
    %495 = vmatpush.msra.mxu0 0.0
    %496 = vmatpush.msra.mxu0 0.0
    %497 = vmatpush.msra.mxu0 0.0
    %498 = vmatpush.msra.mxu0 0.0
    %499 = vmatpush.msra.mxu0 0.0
    %v500 = vand.u32 %v381, 4294901760
    %v501 = vsub.f32 %v381, %v500
    %v502 = vand.u32 %v501, 4294901760
    %503 = vmatpush.msra.mxu0 %v502
    %v504 = vand.u32 %v383, 4294901760
    %505 = vmatmul.f32.gmra.mxu0 %v504
    %v506 = vpop.f32.mrf.mxu0
    %v507 = vadd.f32 %v483, %v506
    %508 = vdwg.mxu0
    %509 = vmatpush.msra.mxu0 0.0
    %510 = vmatpush.msra.mxu0 0.0
    %511 = vmatpush.msra.mxu0 0.0
    %512 = vmatpush.msra.mxu0 0.0
    %513 = vmatpush.msra.mxu0 0.0
    %514 = vmatpush.msra.mxu0 0.0
    %515 = vmatpush.msra.mxu0 0.0
    %516 = vmatpush.msra.mxu0 0.0
    %517 = vmatpush.msra.mxu0 0.0
    %518 = vmatpush.msra.mxu0 0.0
    %519 = vmatpush.msra.mxu0 0.0
    %520 = vmatpush.msra.mxu0 0.0
    %521 = vmatpush.msra.mxu0 0.0
    %522 = vmatpush.msra.mxu0 0.0
    %523 = vmatpush.msra.mxu0 0.0
    %v524 = vand.u32 %v381, 4294901760
    %525 = vmatpush.msra.mxu0 %v524
    %v526 = vand.u32 %v383, 4294901760
    %527 = vmatmul.f32.gmra.mxu0 %v526
    %v528 = vpop.f32.mrf.mxu0
    %v529 = vadd.f32 %v507, %v528
    %530 = vdwg.mxu0
    %s531 = scalar_lea.vmem [#allocation7], 16
    %v532 = vld [vmem:[%s531] sm:$0xff]
    %v533 = vadd.f32 %v532, %v529
    %v534 = vmul.f32 %v533, 1.442695
    %v535 = vpow.pop %v534
    %v536 = vadd.f32 %v377, %v535
    %s537 = scalar_lea.vmem [#allocation2], 24
    %v538 = vld [vmem:[%s537] sm:$0xff]
    %s539 = scalar_lea.vmem [#allocation5], 24
    %v540 = vld [vmem:[%s539] sm:$0xff]
    %v542 = vsel %vm64, %v538, 0
    %544 = vmatpush.msra.mxu0 0.0
    %545 = vmatpush.msra.mxu0 0.0
    %546 = vmatpush.msra.mxu0 0.0
    %547 = vmatpush.msra.mxu0 0.0
    %548 = vmatpush.msra.mxu0 0.0
    %549 = vmatpush.msra.mxu0 0.0
    %550 = vmatpush.msra.mxu0 0.0
    %551 = vmatpush.msra.mxu0 0.0
    %552 = vmatpush.msra.mxu0 0.0
    %553 = vmatpush.msra.mxu0 0.0
    %554 = vmatpush.msra.mxu0 0.0
    %555 = vmatpush.msra.mxu0 0.0
    %556 = vmatpush.msra.mxu0 0.0
    %557 = vmatpush.msra.mxu0 0.0
    %558 = vmatpush.msra.mxu0 0.0
    %v559 = vand.u32 %v540, 4294901760
    %560 = vmatpush.msra.mxu0 %v559
    %v561 = vand.u32 %v542, 4294901760
    %v562 = vsub.f32 %v542, %v561
    %v563 = vand.u32 %v562, 4294901760
    %v564 = vsub.f32 %v562, %v563
    %v565 = vand.u32 %v564, 4294901760
    %566 = vmatmul.f32.gmra.mxu0 %v565
    %v567 = vpop.f32.mrf.mxu0
    %v568 = vadd.f32 0.0, %v567
    %569 = vdwg.mxu0
    %570 = vmatpush.msra.mxu0 0.0
    %571 = vmatpush.msra.mxu0 0.0
    %572 = vmatpush.msra.mxu0 0.0
    %573 = vmatpush.msra.mxu0 0.0
    %574 = vmatpush.msra.mxu0 0.0
    %575 = vmatpush.msra.mxu0 0.0
    %576 = vmatpush.msra.mxu0 0.0
    %577 = vmatpush.msra.mxu0 0.0
    %578 = vmatpush.msra.mxu0 0.0
    %579 = vmatpush.msra.mxu0 0.0
    %580 = vmatpush.msra.mxu0 0.0
    %581 = vmatpush.msra.mxu0 0.0
    %582 = vmatpush.msra.mxu0 0.0
    %583 = vmatpush.msra.mxu0 0.0
    %584 = vmatpush.msra.mxu0 0.0
    %v585 = vand.u32 %v540, 4294901760
    %v586 = vsub.f32 %v540, %v585
    %v587 = vand.u32 %v586, 4294901760
    %v588 = vsub.f32 %v586, %v587
    %v589 = vand.u32 %v588, 4294901760
    %590 = vmatpush.msra.mxu0 %v589
    %v591 = vand.u32 %v542, 4294901760
    %592 = vmatmul.f32.gmra.mxu0 %v591
    %v593 = vpop.f32.mrf.mxu0
    %v594 = vadd.f32 %v568, %v593
    %595 = vdwg.mxu0
    %596 = vmatpush.msra.mxu0 0.0
    %597 = vmatpush.msra.mxu0 0.0
    %598 = vmatpush.msra.mxu0 0.0
    %599 = vmatpush.msra.mxu0 0.0
    %600 = vmatpush.msra.mxu0 0.0
    %601 = vmatpush.msra.mxu0 0.0
    %602 = vmatpush.msra.mxu0 0.0
    %603 = vmatpush.msra.mxu0 0.0
    %604 = vmatpush.msra.mxu0 0.0
    %605 = vmatpush.msra.mxu0 0.0
    %606 = vmatpush.msra.mxu0 0.0
    %607 = vmatpush.msra.mxu0 0.0
    %608 = vmatpush.msra.mxu0 0.0
    %609 = vmatpush.msra.mxu0 0.0
    %610 = vmatpush.msra.mxu0 0.0
    %v611 = vand.u32 %v540, 4294901760
    %v612 = vsub.f32 %v540, %v611
    %613 = vmatpush.msra.mxu0 %v612
    %v614 = vand.u32 %v542, 4294901760
    %v615 = vsub.f32 %v542, %v614
    %616 = vmatmul.f32.gmra.mxu0 %v615
    %v617 = vpop.f32.mrf.mxu0
    %v618 = vadd.f32 %v594, %v617
    %619 = vdwg.mxu0
    %620 = vmatpush.msra.mxu0 0.0
    %621 = vmatpush.msra.mxu0 0.0
    %622 = vmatpush.msra.mxu0 0.0
    %623 = vmatpush.msra.mxu0 0.0
    %624 = vmatpush.msra.mxu0 0.0
    %625 = vmatpush.msra.mxu0 0.0
    %626 = vmatpush.msra.mxu0 0.0
    %627 = vmatpush.msra.mxu0 0.0
    %628 = vmatpush.msra.mxu0 0.0
    %629 = vmatpush.msra.mxu0 0.0
    %630 = vmatpush.msra.mxu0 0.0
    %631 = vmatpush.msra.mxu0 0.0
    %632 = vmatpush.msra.mxu0 0.0
    %633 = vmatpush.msra.mxu0 0.0
    %634 = vmatpush.msra.mxu0 0.0
    %v635 = vand.u32 %v540, 4294901760
    %636 = vmatpush.msra.mxu0 %v635
    %v637 = vand.u32 %v542, 4294901760
    %v638 = vsub.f32 %v542, %v637
    %v639 = vand.u32 %v638, 4294901760
    %640 = vmatmul.f32.gmra.mxu0 %v639
    %v641 = vpop.f32.mrf.mxu0
    %v642 = vadd.f32 %v618, %v641
    %643 = vdwg.mxu0
    %644 = vmatpush.msra.mxu0 0.0
    %645 = vmatpush.msra.mxu0 0.0
    %646 = vmatpush.msra.mxu0 0.0
    %647 = vmatpush.msra.mxu0 0.0
    %648 = vmatpush.msra.mxu0 0.0
    %649 = vmatpush.msra.mxu0 0.0
    %650 = vmatpush.msra.mxu0 0.0
    %651 = vmatpush.msra.mxu0 0.0
    %652 = vmatpush.msra.mxu0 0.0
    %653 = vmatpush.msra.mxu0 0.0
    %654 = vmatpush.msra.mxu0 0.0
    %655 = vmatpush.msra.mxu0 0.0
    %656 = vmatpush.msra.mxu0 0.0
    %657 = vmatpush.msra.mxu0 0.0
    %658 = vmatpush.msra.mxu0 0.0
    %v659 = vand.u32 %v540, 4294901760
    %v660 = vsub.f32 %v540, %v659
    %v661 = vand.u32 %v660, 4294901760
    %662 = vmatpush.msra.mxu0 %v661
    %v663 = vand.u32 %v542, 4294901760
    %664 = vmatmul.f32.gmra.mxu0 %v663
    %v665 = vpop.f32.mrf.mxu0
    %v666 = vadd.f32 %v642, %v665
    %667 = vdwg.mxu0
    %668 = vmatpush.msra.mxu0 0.0
    %669 = vmatpush.msra.mxu0 0.0
    %670 = vmatpush.msra.mxu0 0.0
    %671 = vmatpush.msra.mxu0 0.0
    %672 = vmatpush.msra.mxu0 0.0
    %673 = vmatpush.msra.mxu0 0.0
    %674 = vmatpush.msra.mxu0 0.0
    %675 = vmatpush.msra.mxu0 0.0
    %676 = vmatpush.msra.mxu0 0.0
    %677 = vmatpush.msra.mxu0 0.0
    %678 = vmatpush.msra.mxu0 0.0
    %679 = vmatpush.msra.mxu0 0.0
    %680 = vmatpush.msra.mxu0 0.0
    %681 = vmatpush.msra.mxu0 0.0
    %682 = vmatpush.msra.mxu0 0.0
    %v683 = vand.u32 %v540, 4294901760
    %684 = vmatpush.msra.mxu0 %v683
    %v685 = vand.u32 %v542, 4294901760
    %686 = vmatmul.f32.gmra.mxu0 %v685
    %v687 = vpop.f32.mrf.mxu0
    %v688 = vadd.f32 %v666, %v687
    %689 = vdwg.mxu0
    %s690 = scalar_lea.vmem [#allocation7], 24
    %v691 = vld [vmem:[%s690] sm:$0xff]
    %v692 = vadd.f32 %v691, %v688
    %v693 = vmul.f32 %v692, 1.442695
    %v694 = vpow.pop %v693
    %v695 = vadd.f32 %v536, %v694
    %vm696 = vcmask 130048
    %697 = vst.msk [vmem:[#allocation8] sm:$0xff] %vm696, %v695
    // Predicated region
    $region26: #{tpu_custom_call.1} parent=1 // pred_check
      _
    $region27: #{tpu_custom_call.1} parent=1 // pred_check_branch
      %699 = sbr.rel (0) target = $region29
    $region28: #{tpu_custom_call.1} parent=1 // pred_region
      %701 = vsyncadd [#allocation4], 0
      %s703 = sshll.u32 [#allocation8], 4
      %s704 = int_to_ptr.vmem [resolvable:$true] %s703
      %s705 = sshll.u32 %s3, 4
      %s706 = int_to_ptr.hbm [resolvable:$true] %s705
      %708 = dma.vmem_to_hbm [thread:$0]  %s704, 128, %s706, [#allocation4]
    $region29: #{tpu_custom_call.1} parent=1 // pred_fallthru
      _
    // Predicated region
    $region30: #{tpu_custom_call.1} parent=1 // pred_check
      _
    $region31: #{tpu_custom_call.1} parent=1 // pred_check_branch
      %710 = sbr.rel (0) target = $region33
    $region32: #{tpu_custom_call.1} parent=1 // pred_region
      %712 = dma.done [#allocation4], 128
    $region33: #{tpu_custom_call.1} parent=1 // pred_fallthru
      _
    %713 = vsyncpa [#allocation3], 1
    %714 = vsyncpa [#allocation6], 1
    %715 = vsyncpa [#allocation4], 1

</llo_original>
